<compile_context>
chip_gen: v7x
topology: tpu7x:2x2x1
jax: 0.10.0
libtpu: 0.0.40
codegen_flags: <defaults>
</compile_context>

<pallas_src>
import jax
import jax.numpy as jnp
from jax.experimental import pallas as pl
from jax.experimental.pallas import tpu as pltpu


def _h_swish_kernel(x_ref, o_ref):
    # h_swish(x) = x * relu6(x + 3) / 6  ==  x * clip(x/6 + 0.5, 0, 1)
    x = x_ref[...]
    gate = jnp.clip(x * (1.0 / 6.0) + 0.5, 0.0, 1.0)
    o_ref[...] = (x * gate).astype(o_ref.dtype)


def h_swish(x, *, target_block_bytes=8 * 1024 * 1024):
    """Elementwise h_swish over an arbitrary-shaped array via a lane-dense 2-D tiling."""
    orig_shape = x.shape
    dtype = x.dtype
    n = x.size
    if n == 0:
        return x

    itemsize = jnp.dtype(dtype).itemsize
    # Packed-tile sublane multiple: 8 (f32), 16 (bf16/fp16), 32 (int8/fp8).
    sub_mult = 8 * (4 // itemsize)

    flat = x.reshape(-1)  # contiguous reshape: free (no HBM pass)

    # Lane-dense column width: largest of {1024,512,256,128} that divides n.
    cols = None
    for cand in (1024, 512, 256, 128):
        if n % cand == 0:
            cols = cand
            break

    pad = 0
    if cols is None:
        # Rare fallback (n not a multiple of 128): pad the flat tail up to a
        # lane multiple. This costs one extra pad pass + one slice pass, but
        # is never hit for typical NN activation shapes.
        cols = 512
        padded_n = ((n + cols - 1) // cols) * cols
        pad = padded_n - n
        flat = jnp.pad(flat, (0, pad))

    rows = flat.size // cols
    x2d = flat.reshape(rows, cols)

    # Row block: sublane-aligned, ~target_block_bytes per buffer, and capped
    # near ceil(rows/2) so the grid has >= 2 steps for v7x megacore sharding.
    row_block_max = max(
        sub_mult, (target_block_bytes // (cols * itemsize)) // sub_mult * sub_mult
    )
    if rows <= sub_mult:
        row_block = rows  # block dim equals the full array dim: always legal
    else:
        half = ((pl.cdiv(rows, 2) + sub_mult - 1) // sub_mult) * sub_mult
        row_block = max(sub_mult, min(row_block_max, half))
    grid = (pl.cdiv(rows, row_block),)

    # Scoped VMEM sized from the actual footprint: in + out, double-buffered,
    # plus headroom. Capped at 48 MiB to stay safe on v7x's 64 MiB VMEM.
    block_bytes = row_block * cols * itemsize
    vmem_limit = min(
        48 * 1024 * 1024, max(32 * 1024 * 1024, 4 * block_bytes + 4 * 1024 * 1024)
    )

    out2d = pl.pallas_call(
        _h_swish_kernel,
        out_shape=jax.ShapeDtypeStruct((rows, cols), dtype),
        grid_spec=pltpu.PrefetchScalarGridSpec(
            num_scalar_prefetch=0,
            grid=grid,
            in_specs=[pl.BlockSpec((row_block, cols), lambda i: (i, 0))],
            out_specs=pl.BlockSpec((row_block, cols), lambda i: (i, 0)),
        ),
        compiler_params=pltpu.CompilerParams(
            # Elementwise -> grid steps independent; v7x shards across both
            # TensorCores. No-op on single-TC v5e/v6e.
            dimension_semantics=("parallel",),
            vmem_limit_bytes=vmem_limit,
        ),
    )(x2d)

    out = out2d.reshape(-1)
    if pad:
        out = out[:n]
    return out.reshape(orig_shape)


def h_swish_ref(x):
    """Pure-JAX reference mirroring the PyTorch forward: x * relu6(x + 3) / 6."""
    return x * jnp.clip(x + 3.0, 0.0, 6.0) / 6.0


if __name__ == "__main__":
    key = jax.random.PRNGKey(0)

    # Main shape consistent with the module (any NCHW tensor works).
    B, C, H, W = 2, 4, 16, 16
    k0, k1, k2 = jax.random.split(key, 3)
    # Scale inputs so the linear region and both ReLU6 saturation regions
    # (x <= -3 and x >= 3) are exercised.
    x = 4.0 * jax.random.normal(k0, (B, C, H, W), dtype=jnp.float32)

    out = jax.block_until_ready(h_swish(x))
    ref = h_swish_ref(x)
    assert out.shape == (B, C, H, W)
    assert jnp.allclose(out, ref, atol=1e-5, rtol=1e-5), "mismatch vs reference"

    # Extra check: multi-step grid with a ragged (masked) last row block.
    x2 = 4.0 * jax.random.normal(k1, (2, 3, 40, 128), dtype=jnp.float32)
    out2 = jax.block_until_ready(h_swish(x2))
    assert jnp.allclose(out2, h_swish_ref(x2), atol=1e-5, rtol=1e-5), "mismatch (grid>1)"

    # Extra check: non-128-divisible fallback path.
    x3 = 4.0 * jax.random.normal(k2, (3, 5, 7), dtype=jnp.float32)
    out3 = jax.block_until_ready(h_swish(x3))
    assert jnp.allclose(out3, h_swish_ref(x3), atol=1e-5, rtol=1e-5), "mismatch (fallback)"

    print("KERNEL_OK")
</pallas_src>

<mosaic_0001>
module attributes {stable_mosaic.version = 11 : i64} {
  func.func @_h_swish_kernel(%arg0: i32, %arg1: memref<2x1024xf32, #tpu.memory_space<vmem>>, %arg2: memref<2x1024xf32, #tpu.memory_space<vmem>>) attributes {dimension_semantics = [#tpu.dimension_semantics<parallel>], iteration_bounds = array<i64: 1>, scalar_prefetch = 0 : i64, scratch_operands = 0 : i64, tpu.core_type = #tpu.core_type<tc>, window_params = [{transform_indices = @transform_0, window_bounds = array<i64: 2, 1024>}, {transform_indices = @transform_1, window_bounds = array<i64: 2, 1024>}]} {
    %c0 = arith.constant 0 : index
    %c0_0 = arith.constant 0 : index
    %0 = vector.load %arg1[%c0, %c0_0] : memref<2x1024xf32, #tpu.memory_space<vmem>>, vector<2x1024xf32>
    %cst = arith.constant 0.166666672 : f32
    %1 = vector.broadcast %cst : f32 to vector<2x1024xf32>
    %2 = arith.mulf %0, %1 : vector<2x1024xf32>
    %cst_1 = arith.constant 5.000000e-01 : f32
    %3 = vector.broadcast %cst_1 : f32 to vector<2x1024xf32>
    %4 = arith.addf %2, %3 : vector<2x1024xf32>
    %cst_2 = arith.constant 0.000000e+00 : f32
    %cst_3 = arith.constant 1.000000e+00 : f32
    %5 = vector.broadcast %cst_2 : f32 to vector<2x1024xf32>
    %6 = arith.maximumf %5, %4 : vector<2x1024xf32>
    %7 = vector.broadcast %cst_3 : f32 to vector<2x1024xf32>
    %8 = arith.minimumf %7, %6 : vector<2x1024xf32>
    %9 = arith.mulf %0, %8 : vector<2x1024xf32>
    %c0_4 = arith.constant 0 : index
    %c0_5 = arith.constant 0 : index
    %10 = vector.load %arg2[%c0_4, %c0_5] : memref<2x1024xf32, #tpu.memory_space<vmem>>, vector<2x1024xf32>
    tpu.vector_store %arg2[%c0_4, %c0_5], %9 {strides = array<i32>} : memref<2x1024xf32, #tpu.memory_space<vmem>>, vector<2x1024xf32>,
    return
  }
  func.func @transform_0(%arg0: i32) -> (i32, i32) {
    %c0_i32 = arith.constant 0 : i32
    %c0_i32_0 = arith.constant 0 : i32
    return %arg0, %c0_i32 : i32, i32
  }
  func.func @transform_1(%arg0: i32) -> (i32, i32) {
    %c0_i32 = arith.constant 0 : i32
    %c0_i32_0 = arith.constant 0 : i32
    return %arg0, %c0_i32 : i32, i32
  }
}

</mosaic_0001>

<llo_original>
// kernel: tpu_custom_call.1
$region0: #{tpu_custom_call.1}
  #allocation0 [shape = 'u32[]', space=smem, size = 0x4, offset = 0x4, fixed_abs, tag = 'smem constant byte address 0x4 - core index']
  #allocation1 [shape = 'u32[144,128]{1,0:T(1,128)}', space=vmem, size = 0x12000, scoped, tag = 'internal scratch']
  %s0 = inlined_call_operand.hbm [shape: f32[2,1024], index: 0, kind: input, shape index: {}]
  %s1 = inlined_call_operand.hbm [shape: f32[2,1024], index: 1, kind: output, shape index: {}]
  %s2 = sld [smem:[#allocation0]]
  $region18: #{tpu_custom_call.1} parent=0
    _
  %s4 = ssub.s32 1, %s2
  %s5 = scalar_select 0, %s4, %s2
  $region1: #{tpu_custom_call.1} parent=0
    #allocation2 [shape = 'u8[8192]{0}', space=vmem, size = 0x2000, scoped, tag = 'input window, operand 0, single buffered']
    #allocation3 [shape = 's32[1]{0}', space=sflag, size = 0x4, scoped, tag = 'scoped memory for tpu_custom_call.1']
    #allocation4 [shape = 's32[1]{0}', space=sflag, size = 0x4, scoped, tag = 'scoped memory for tpu_custom_call.1']
    #allocation5 [shape = 'u8[8192]{0}', space=vmem, size = 0x2000, scoped, tag = 'output window, operand 0, single buffered']
    %6 = vsyncpa [#allocation3], 0
    %7 = vsyncpa [#allocation4], 0
    // Predicated region
    $region2: #{tpu_custom_call.1} parent=1 // pred_check
      _
    $region3: #{tpu_custom_call.1} parent=1 // pred_check_branch
      %9 = sbr.rel (0) target = $region5
    $region4: #{tpu_custom_call.1} parent=1 // pred_region
      %s11 = ssub.s32 256, 256
      %12 = vsyncadd [#allocation3], %s11
      %s14 = sshll.u32 [#allocation2], 4
      %s15 = int_to_ptr.vmem [resolvable:$true] %s14
      %17 = dma.hbm_to_vmem [thread:$0]  %s0, 256, %s15, [#allocation3]
    $region5: #{tpu_custom_call.1} parent=1 // pred_fallthru
      _
    // Predicated region
    $region6: #{tpu_custom_call.1} parent=1 // pred_check
      _
    $region7: #{tpu_custom_call.1} parent=1 // pred_check_branch
      %19 = sbr.rel (0) target = $region9
    $region8: #{tpu_custom_call.1} parent=1 // pred_region
      %20 = dma.done [#allocation3], 256
    $region9: #{tpu_custom_call.1} parent=1 // pred_fallthru
      _
    %v21 = vld [vmem:[#allocation2] sm:$0xff]
    %v22 = vld [vmem:[#allocation2 + $0x8] sm:$0xff]
    %v23 = vmul.f32 %v21, 0.16666667
    %v24 = vmul.f32 %v22, 0.16666667
    %v25 = vadd.f32 %v23, 0.5
    %v26 = vadd.f32 %v24, 0.5
    %v27 = vmax.f32 %v25, 0.0
    %v28 = vmax.f32 %v26, 0.0
    %v29 = vmin.f32 %v27, 1.0
    %v30 = vmin.f32 %v28, 1.0
    %v31 = vmul.f32 %v21, %v29
    %v32 = vmul.f32 %v22, %v30
    %33 = vst [vmem:[#allocation5] sm:$0xff] %v31
    %34 = vst [vmem:[#allocation5 + $0x8] sm:$0xff] %v32
    // Predicated region
    $region10: #{tpu_custom_call.1} parent=1 // pred_check
      _
    $region11: #{tpu_custom_call.1} parent=1 // pred_check_branch
      %36 = sbr.rel (0) target = $region13
    $region12: #{tpu_custom_call.1} parent=1 // pred_region
      %s38 = ssub.s32 256, 256
      %39 = vsyncadd [#allocation4], %s38
      %s41 = sshll.u32 [#allocation5], 4
      %s42 = int_to_ptr.vmem [resolvable:$true] %s41
      %44 = dma.vmem_to_hbm [thread:$0]  %s42, 256, %s1, [#allocation4]
    $region13: #{tpu_custom_call.1} parent=1 // pred_fallthru
      _
    // Predicated region
    $region14: #{tpu_custom_call.1} parent=1 // pred_check
      _
    $region15: #{tpu_custom_call.1} parent=1 // pred_check_branch
      %46 = sbr.rel (0) target = $region17
    $region16: #{tpu_custom_call.1} parent=1 // pred_region
      %47 = dma.done [#allocation4], 256
    $region17: #{tpu_custom_call.1} parent=1 // pred_fallthru
      _
    %48 = vsyncpa [#allocation3], 1
    %49 = vsyncpa [#allocation4], 1

</llo_original>
